<compile_context>
chip_gen: v7x
topology: tpu7x:2x2x1
jax: 0.10.0
libtpu: 0.0.40
codegen_flags: <defaults>
</compile_context>

<pallas_src>
import functools

import jax
import jax.numpy as jnp
from jax.experimental import pallas as pl
from jax.experimental.pallas import tpu as pltpu

LRELU_SLOPE = 0.2
IN_EPS = 1e-5
EXPANSION = 4

ACT_DTYPE = jnp.bfloat16      # activation dtype flowing through the network
MXU_DTYPE = jnp.bfloat16      # matmul operand dtype (f32 accumulation)
VMEM_LIMIT = 32 * 1024 * 1024  # explicit scoped-VMEM cap: safe on v5e/v6e/v7x


def _round_up(x, m):
    return (x + m - 1) // m * m


# ----------------------------- Pallas kernels ------------------------------

def _matmul_bias_kernel_single(a_ref, w_ref, b_ref, o_ref, *, apply_lrelu, slope):
    """Single-K-step matmul: full K in one tile, no accumulator scratch."""
    out = jnp.dot(a_ref[...], w_ref[...], preferred_element_type=jnp.float32)
    out = out + b_ref[...].astype(jnp.float32)
    if apply_lrelu:
        out = jnp.where(out >= 0, out, slope * out)
    o_ref[...] = out.astype(o_ref.dtype)


def _matmul_bias_kernel_kloop(a_ref, w_ref, b_ref, o_ref, acc_ref, *, apply_lrelu, slope):
    """K-tiled matmul with resident f32 accumulator; epilogue on the last K step."""
    k = pl.program_id(2)

    @pl.when(k == 0)
    def _():
        acc_ref[...] = jnp.zeros_like(acc_ref)

    acc_ref[...] += jnp.dot(a_ref[...], w_ref[...],
                            preferred_element_type=jnp.float32)

    @pl.when(k == pl.num_programs(2) - 1)
    def _():
        out = acc_ref[...] + b_ref[...].astype(jnp.float32)
        if apply_lrelu:
            out = jnp.where(out >= 0, out, slope * out)
        o_ref[...] = out.astype(o_ref.dtype)


def _pick_tiles(M, K, N):
    """Generation-safe tile choice: no padding needed at this network's shapes."""
    # M tile: full M for small M (exact, no pad), otherwise 256 rows.
    tm = _round_up(M, 8) if M <= 1024 else 256
    # N tile: full N up to 256 (feeds the 256-wide MXU on v6e/v7x); otherwise 256/128.
    if N <= 256:
        tn = N
    elif N % 256 == 0:
        tn = 256
    elif N % 128 == 0:
        tn = 128
    else:
        tn = 128          # fallback: requires N padding (not hit in this network)
    # K tile: keep a single K step whenever K fits (kills acc init/finalize + K pad);
    # otherwise tile with a divisor of K (all large Ks here are multiples of 128).
    if K % 128 != 0 or K <= 2048:
        tk = K
    elif K % 512 == 0:
        tk = 512
    elif K % 256 == 0:
        tk = 256
    else:
        tk = 128
    return tm, tn, tk


def matmul_bias(a, w, b, *, apply_lrelu=False, slope=LRELU_SLOPE, out_dtype=None):
    """(M,K) @ (K,N) + b[N] on the MXU (bf16 operands, f32 accumulate),
    optional fused LeakyReLU epilogue."""
    M, K = a.shape
    K2, N = w.shape
    assert K == K2
    out_dtype = a.dtype if out_dtype is None else out_dtype

    tm, tn, tk = _pick_tiles(M, K, N)
    Mp, Np = _round_up(M, tm), _round_up(N, tn)

    a_p = a.astype(MXU_DTYPE)
    w_p = w.astype(MXU_DTYPE)
    b_p = b.reshape(1, N).astype(jnp.float32)
    if Mp != M:                                      # fallback only; no-op at these shapes
        a_p = jnp.pad(a_p, ((0, Mp - M), (0, 0)))
    if Np != N:
        w_p = jnp.pad(w_p, ((0, 0), (0, Np - N)))
        b_p = jnp.pad(b_p, ((0, 0), (0, Np - N)))

    nk = K // tk
    if nk == 1:
        out = pl.pallas_call(
            functools.partial(_matmul_bias_kernel_single,
                              apply_lrelu=apply_lrelu, slope=slope),
            out_shape=jax.ShapeDtypeStruct((Mp, Np), out_dtype),
            grid_spec=pltpu.PrefetchScalarGridSpec(
                num_scalar_prefetch=0,
                grid=(Mp // tm, Np // tn),
                in_specs=[
                    pl.BlockSpec((tm, tk), lambda i, j: (i, 0)),
                    pl.BlockSpec((tk, tn), lambda i, j: (0, j)),
                    pl.BlockSpec((1, tn), lambda i, j: (0, j)),
                ],
                out_specs=pl.BlockSpec((tm, tn), lambda i, j: (i, j)),
            ),
            compiler_params=pltpu.CompilerParams(
                dimension_semantics=("parallel", "parallel"),
                vmem_limit_bytes=VMEM_LIMIT),
        )(a_p, w_p, b_p)
    else:
        out = pl.pallas_call(
            functools.partial(_matmul_bias_kernel_kloop,
                              apply_lrelu=apply_lrelu, slope=slope),
            out_shape=jax.ShapeDtypeStruct((Mp, Np), out_dtype),
            grid_spec=pltpu.PrefetchScalarGridSpec(
                num_scalar_prefetch=0,
                grid=(Mp // tm, Np // tn, nk),
                in_specs=[
                    pl.BlockSpec((tm, tk), lambda i, j, k: (i, k)),
                    pl.BlockSpec((tk, tn), lambda i, j, k: (k, j)),
                    pl.BlockSpec((1, tn), lambda i, j, k: (0, j)),
                ],
                out_specs=pl.BlockSpec((tm, tn), lambda i, j, k: (i, j)),
                scratch_shapes=[pltpu.VMEM((tm, tn), jnp.float32)],
            ),
            compiler_params=pltpu.CompilerParams(
                dimension_semantics=("parallel", "parallel", "arbitrary"),
                vmem_limit_bytes=VMEM_LIMIT),
        )(a_p, w_p, b_p)

    if Mp != M or Np != N:
        out = out[:M, :N]
    return out


def _in_kernel(x_ref, o_ref, *, eps, apply_lrelu, slope):
    """InstanceNorm (affine=False, biased var) over HW, optional LeakyReLU."""
    x = x_ref[...].astype(jnp.float32)                 # (1, HW, tc)
    mean = jnp.mean(x, axis=1, keepdims=True)
    cen = x - mean
    var = jnp.mean(cen * cen, axis=1, keepdims=True)   # biased var == PyTorch IN
    y = cen * jax.lax.rsqrt(var + eps)
    if apply_lrelu:
        y = jnp.where(y >= 0, y, slope * y)
    o_ref[...] = y.astype(o_ref.dtype)


def _in_res_lrelu_kernel(x_ref, r_ref, o_ref, *, eps, slope):
    """Fused InstanceNorm + residual add + LeakyReLU (bottleneck c3 epilogue)."""
    x = x_ref[...].astype(jnp.float32)                 # (1, HW, tc)
    mean = jnp.mean(x, axis=1, keepdims=True)
    cen = x - mean
    var = jnp.mean(cen * cen, axis=1, keepdims=True)
    y = cen * jax.lax.rsqrt(var + eps) + r_ref[...].astype(jnp.float32)
    y = jnp.where(y >= 0, y, slope * y)
    o_ref[...] = y.astype(o_ref.dtype)


def instance_norm(x, *, apply_lrelu, residual=None, eps=IN_EPS, slope=LRELU_SLOPE):
    """x: (B, HW, C). Per-(sample, channel) normalization over HW (affine=False).
    If `residual` is given, fuses out = LeakyReLU(IN(x) + residual)."""
    B, HW, C = x.shape
    if C <= 256:
        tc = C
    elif C % 256 == 0:
        tc = 256
    elif C % 128 == 0:
        tc = 128
    else:
        tc = C
    grid = (B, C // tc)
    blk = pl.BlockSpec((1, HW, tc), lambda b, c: (b, 0, c))

    if residual is None:
        kernel = functools.partial(_in_kernel, eps=eps,
                                   apply_lrelu=apply_lrelu, slope=slope)
        in_specs, args = [blk], (x,)
    else:
        kernel = functools.partial(_in_res_lrelu_kernel, eps=eps, slope=slope)
        in_specs, args = [blk, blk], (x, residual)

    return pl.pallas_call(
        kernel,
        out_shape=jax.ShapeDtypeStruct(x.shape, x.dtype),
        grid_spec=pltpu.PrefetchScalarGridSpec(
            num_scalar_prefetch=0, grid=grid,
            in_specs=in_specs, out_specs=blk),
        compiler_params=pltpu.CompilerParams(
            dimension_semantics=("parallel", "parallel"),
            vmem_limit_bytes=VMEM_LIMIT),
    )(*args)


def _pool_fc_kernel(x_ref, w_ref, b_ref, o_ref):
    """Fused AdaptiveAvgPool2d((1,1)) + flatten + Linear."""
    feat = jnp.mean(x_ref[...].astype(jnp.float32), axis=1)          # (B, C)
    o_ref[...] = (jnp.dot(feat, w_ref[...].astype(jnp.float32),
                          preferred_element_type=jnp.float32)
                  + b_ref[...].astype(jnp.float32))


def global_avg_pool_fc(x, w, b):
    """x: (B, HW, C), w: (C, num_classes), b: (num_classes,) -> (B, num_classes).
    The pooled feature map is tiny, so a single whole-array block is optimal and
    avoids a padded 128x128 MXU tile for a (B,512)x(512,10) matmul."""
    B, HW, C = x.shape
    N = w.shape[1]
    return pl.pallas_call(
        _pool_fc_kernel,
        out_shape=jax.ShapeDtypeStruct((B, N), jnp.float32),
        compiler_params=pltpu.CompilerParams(vmem_limit_bytes=VMEM_LIMIT),
    )(x, w, b.reshape(1, N))


# ------------------------------- glue layers -------------------------------

def _im2col(x, kh, kw, stride, pad):
    """NHWC zero-pad + patch extraction -> (B*Ho*Wo, kh*kw*C).
    TODO(synk): remaining optimization is folding taps into the matmul K grid
    (or an in-kernel DMA gather) to kill the kh*kw HBM amplification."""
    if pad:
        x = jnp.pad(x, ((0, 0), (pad, pad), (pad, pad), (0, 0)))
    B, H, W, C = x.shape
    Ho = (H - kh) // stride + 1
    Wo = (W - kw) // stride + 1
    cols = []
    for i in range(kh):
        for j in range(kw):
            cols.append(x[:, i:i + Ho * stride:stride,
                          j:j + Wo * stride:stride, :])
    patches = jnp.concatenate(cols, axis=-1)        # (B, Ho, Wo, kh*kw*C)
    return patches.reshape(B * Ho * Wo, kh * kw * C), (B, Ho, Wo)


def conv2d_layer(x, p, *, stride, pad, norm, activation):
    """Conv2dLayer: zero-pad -> conv -> (InstanceNorm) -> (LeakyReLU 0.2)."""
    w, b = p['w'], p['b']                           # w: (kh, kw, Cin, Cout)
    kh, kw, cin, cout = w.shape
    if kh == 1 and kw == 1 and pad == 0:
        # 1x1 conv: pure matmul, no im2col (strided view for stride>1).
        xs = x if stride == 1 else x[:, ::stride, ::stride, :]
        B, Ho, Wo, _ = xs.shape
        patches = xs.reshape(B * Ho * Wo, cin)
    else:
        patches, (B, Ho, Wo) = _im2col(x, kh, kw, stride, pad)
    wmat = w.reshape(kh * kw * cin, cout)
    fuse_act = (activation == 'lrelu') and (norm == 'none')
    y = matmul_bias(patches, wmat, b, apply_lrelu=fuse_act)
    y = y.reshape(B, Ho * Wo, cout)
    if norm == 'in':
        y = instance_norm(y, apply_lrelu=(activation == 'lrelu'))
    return y.reshape(B, Ho, Wo, cout)


def bottleneck_block(x, p):
    stride, first = p['stride'], p['first']
    out = conv2d_layer(x, p['c1'], stride=1, pad=0, norm='in', activation='lrelu')
    out = conv2d_layer(out, p['c2'], stride=stride, pad=1, norm='in', activation='lrelu')
    if first:
        res = conv2d_layer(x, p['ds'], stride=stride, pad=0, norm='in', activation='none')
    else:
        res = x
    # c3 = 1x1 conv (pure matmul), then ONE fused IN + residual-add + LeakyReLU kernel.
    B, H, W, cin = out.shape
    w3, b3 = p['c3']['w'], p['c3']['b']
    cout = w3.shape[-1]
    y = matmul_bias(out.reshape(B * H * W, cin), w3.reshape(cin, cout), b3,
                    apply_lrelu=False)
    y = instance_norm(y.reshape(B, H * W, cout), apply_lrelu=True,
                      residual=res.reshape(B, H * W, cout))
    return y.reshape(B, H, W, cout)


def resnet_in_forward(params, x_nchw):
    x = jnp.transpose(x_nchw, (0, 2, 3, 1)).astype(ACT_DTYPE)   # NCHW -> NHWC once
    x = conv2d_layer(x, params['begin1'], stride=1, pad=3, norm='none', activation='lrelu')
    x = conv2d_layer(x, params['begin2'], stride=2, pad=1, norm='in', activation='lrelu')
    x = conv2d_layer(x, params['begin3'], stride=2, pad=1, norm='in', activation='lrelu')
    for li in range(1, 5):
        for bp in params[f'layer{li}']:
            x = bottleneck_block(x, bp)
    x = conv2d_layer(x, params['fusion'], stride=1, pad=1, norm='none', activation='lrelu')
    B, H, W, C = x.shape
    logits = global_avg_pool_fc(x.reshape(B, H * W, C), params['fc_w'], params['fc_b'])
    return logits


# ------------------------------ parameter init -----------------------------

def _init_conv(key, cin, cout, k):
    fan_in = cin * k * k
    w = jax.random.normal(key, (k, k, cin, cout), jnp.float32) * (2.0 / fan_in) ** 0.5
    return {'w': w.astype(MXU_DTYPE), 'b': jnp.zeros((cout,), jnp.float32)}


def init_params(key, in_channels=3, num_classes=10, layers=(1, 1, 1, 1)):
    keys = iter(jax.random.split(key, 64))
    p = {}
    p['begin1'] = _init_conv(next(keys), in_channels, 64, 7)
    p['begin2'] = _init_conv(next(keys), 64, 64, 3)
    p['begin3'] = _init_conv(next(keys), 64, 64, 3)
    inplanes = 64
    for li, (planes, nblocks, stride) in enumerate(
            zip((64, 128, 256, 512), layers, (1, 2, 2, 2)), start=1):
        blocks = []
        for bi in range(nblocks):
            s = stride if bi == 0 else 1
            bp = {
                'c1': _init_conv(next(keys), inplanes, planes, 1),
                'c2': _init_conv(next(keys), planes, planes, 3),
                'c3': _init_conv(next(keys), planes, planes * EXPANSION, 1),
                'stride': s,
                'first': bi == 0,
            }
            if bi == 0:
                bp['ds'] = _init_conv(next(keys), inplanes, planes * EXPANSION, 1)
            blocks.append(bp)
            inplanes = planes * EXPANSION
        p[f'layer{li}'] = blocks
    p['fusion'] = _init_conv(next(keys), 512 * EXPANSION, 512, 3)
    p['fc_w'] = jax.random.normal(next(keys), (512, num_classes),
                                  jnp.float32) * (1.0 / 512) ** 0.5
    p['fc_b'] = jnp.zeros((num_classes,), jnp.float32)
    return p


# ----------------------------------- main -----------------------------------

if __name__ == "__main__":
    key = jax.random.PRNGKey(0)
    pkey, xkey = jax.random.split(key)
    # Small config: bottleneck layers=[1,1,1,1], num_classes=10, 32x32 RGB input.
    params = init_params(pkey, in_channels=3, num_classes=10, layers=(1, 1, 1, 1))
    x = jax.random.normal(xkey, (2, 3, 32, 32), jnp.float32)   # NCHW, like PyTorch
    logits = resnet_in_forward(params, x)
    logits = jax.block_until_ready(logits)
    assert logits.shape == (2, 10), logits.shape
    print("KERNEL_OK")
</pallas_src>

<mosaic_0001>
module attributes {stable_mosaic.version = 11 : i64} {
  func.func @_matmul_bias_kernel_single(%arg0: i32, %arg1: i32, %arg2: memref<256x147xbf16, #tpu.memory_space<vmem>>, %arg3: memref<147x64xbf16, #tpu.memory_space<vmem>>, %arg4: memref<1x64xf32, #tpu.memory_space<vmem>>, %arg5: memref<256x64xbf16, #tpu.memory_space<vmem>>) attributes {dimension_semantics = [#tpu.dimension_semantics<parallel>, #tpu.dimension_semantics<parallel>], iteration_bounds = array<i64: 8, 1>, scalar_prefetch = 0 : i64, scratch_operands = 0 : i64, tpu.core_type = #tpu.core_type<tc>, window_params = [{transform_indices = @transform_0, window_bounds = array<i64: 256, 147>}, {transform_indices = @transform_1, window_bounds = array<i64: 147, 64>}, {transform_indices = @transform_2, window_bounds = array<i64: 1, 64>}, {transform_indices = @transform_3, window_bounds = array<i64: 256, 64>}]} {
    %c0 = arith.constant 0 : index
    %c0_0 = arith.constant 0 : index
    %0 = vector.load %arg2[%c0, %c0_0] : memref<256x147xbf16, #tpu.memory_space<vmem>>, vector<256x147xbf16>
    %c0_1 = arith.constant 0 : index
    %c0_2 = arith.constant 0 : index
    %1 = vector.load %arg3[%c0_1, %c0_2] : memref<147x64xbf16, #tpu.memory_space<vmem>>, vector<147x64xbf16>
    %cst = arith.constant dense<0.000000e+00> : vector<256x64xf32>
    %2 = tpu.matmul %0, %1, %cst {dimension_numbers = #tpu.dot_dimension_numbers<[1], [0], [0], [1], [0, 0, 1, 1], [], []>} : vector<256x147xbf16>, vector<147x64xbf16>, vector<256x64xf32> -> vector<256x64xf32>
    %c0_3 = arith.constant 0 : index
    %c0_4 = arith.constant 0 : index
    %3 = vector.load %arg4[%c0_3, %c0_4] : memref<1x64xf32, #tpu.memory_space<vmem>>, vector<1x64xf32>
    %4 = vector.broadcast %3 : vector<1x64xf32> to vector<256x64xf32>
    %5 = arith.addf %2, %4 : vector<256x64xf32>
    %cst_5 = arith.constant 0.000000e+00 : f32
    %6 = vector.broadcast %cst_5 : f32 to vector<256x64xf32>
    %7 = arith.cmpf oge, %5, %6 : vector<256x64xf32>
    %cst_6 = arith.constant 2.000000e-01 : f32
    %8 = vector.broadcast %cst_6 : f32 to vector<256x64xf32>
    %9 = arith.mulf %8, %5 : vector<256x64xf32>
    %10 = arith.select %7, %5, %9 : vector<256x64xi1>, vector<256x64xf32>
    %11 = arith.truncf %10 : vector<256x64xf32> to vector<256x64xbf16>
    %c0_7 = arith.constant 0 : index
    %c0_8 = arith.constant 0 : index
    %12 = vector.load %arg5[%c0_7, %c0_8] : memref<256x64xbf16, #tpu.memory_space<vmem>>, vector<256x64xbf16>
    tpu.vector_store %arg5[%c0_7, %c0_8], %11 {strides = array<i32>} : memref<256x64xbf16, #tpu.memory_space<vmem>>, vector<256x64xbf16>,
    return
  }
  func.func @transform_0(%arg0: i32, %arg1: i32) -> (i32, i32) {
    %c0_i32 = arith.constant 0 : i32
    %c0_i32_0 = arith.constant 0 : i32
    return %arg0, %c0_i32 : i32, i32
  }
  func.func @transform_1(%arg0: i32, %arg1: i32) -> (i32, i32) {
    %c0_i32 = arith.constant 0 : i32
    %c0_i32_0 = arith.constant 0 : i32
    return %c0_i32, %arg1 : i32, i32
  }
  func.func @transform_2(%arg0: i32, %arg1: i32) -> (i32, i32) {
    %c0_i32 = arith.constant 0 : i32
    %c0_i32_0 = arith.constant 0 : i32
    return %c0_i32, %arg1 : i32, i32
  }
  func.func @transform_3(%arg0: i32, %arg1: i32) -> (i32, i32) {
    %c0_i32 = arith.constant 0 : i32
    return %arg0, %arg1 : i32, i32
  }
}

</mosaic_0001>

<llo_original>
// kernel: tpu_custom_call.1
$region0: #{tpu_custom_call.1}
  #allocation0 [shape = 'u32[]', space=smem, size = 0x4, offset = 0x4, fixed_abs, tag = 'smem constant byte address 0x4 - core index']
  #allocation1 [shape = 'u32[144,128]{1,0:T(1,128)}', space=vmem, size = 0x12000, scoped, tag = 'internal scratch']
  %s0 = inlined_call_operand.vmem [shape: bf16[2048,147], index: 0, kind: input, shape index: {}]
  %s1 = inlined_call_operand.vmem [shape: bf16[147,64], index: 1, kind: input, shape index: {}]
  %s2 = inlined_call_operand.vmem [shape: f32[1,64], index: 2, kind: input, shape index: {}]
  %s3 = inlined_call_operand.vmem [shape: bf16[2048,64], index: 3, kind: output, shape index: {}]
  %s4 = sld [smem:[#allocation0]]
  $region45: #{tpu_custom_call.1} parent=0
    _
  %s6 = ssub.s32 1, %s4
  %s7 = scalar_select 0, %s6, %s4
  loop: start=0, step=1, limit=10
  $region2: #{tpu_custom_call.1} parent=0 // loop_pre_header
    _
  $region3: #{tpu_custom_call.1} parent=0 // loop_header
    %s9 = sphi 0, %s13
    %p10 = scmp.ge.s32.totalorder %s9, 10
    %s16 = sphi 0, %s28
    %s17 = sphi 0, %s24
    %s18 = sphi 0, %s16
    %s19 = sphi 0, %s17
    %s20 = sphi 0, %s18
    %s21 = sphi 0, %s19
    %s31 = sphi 0, %s33
    %s34 = sphi 0, %s31
    %s35 = sphi 0, %s34
    %s51 = sphi 0, %s35
    %s57 = sphi 0, %s59
    %s60 = sphi 0, %s57
    %s61 = sphi 0, %s60
    %s77 = sphi 0, %s61
    %s83 = sphi 0, %s85
    %s86 = sphi 0, %s83
    %s87 = sphi 0, %s86
    %s103 = sphi 0, %s87
    %s111 = sphi 0, %s113
    %s114 = sphi 0, %s111
    %s115 = sphi 0, %s114
    %s131 = sphi 0, %s115
  $region4: #{tpu_custom_call.1} parent=0 // loop_header_branch
    %12 = sbr.rel (%p10) target = $region8
  $region5: #{tpu_custom_call.1} parent=0 // loop_body
    %s14 = ssub.s32 %s9, 1
    %s15 = ssub.s32 %s9, 2
    %s22 = sadd.s32 1, %s17
    %p23 = scmp.ge.s32.totalorder %s22, 1
    %s24 = scalar_select %p23, 0, %s22
    %s25 = sadd.s32 1, %s16
    %s26 = scalar_select %p23, %s25, %s16
    %p27 = scmp.ge.s32.totalorder %s26, 8
    %s28 = scalar_select %p27, 0, %s26
    %s29 = ssub.s32 %s16, %s28
    %p30 = scmp.eq.s32.totalorder %s29, 0
    %s32 = sadd.s32 %s31, 1
    %s33 = scalar_select %p30, %s31, %s32
    %p36 = pneg %p30
    %p37 = scmp.eq.s32.totalorder %s9, 7
    %p38 = por %p36, %p37
    %p39 = scmp.ne.s32.totalorder %s31, %s34
    %p40 = scmp.eq.s32.totalorder %s9, 0
    %p41 = por %p39, %p40
    %p42 = scmp.ne.s32.totalorder %s31, %s34
    %p43 = scmp.eq.s32.totalorder %s14, 7
    %p44 = por %p42, %p43
    %p45 = scmp.ne.s32.totalorder %s34, %s35
    %p46 = scmp.eq.s32.totalorder %s14, 0
    %p47 = por %p45, %p46
    %p48 = scmp.ne.s32.totalorder %s34, %s35
    %p49 = scmp.eq.s32.totalorder %s15, 7
    %p50 = por %p48, %p49
    %p52 = scmp.ne.s32.totalorder %s35, %s51
    %p53 = scmp.eq.s32.totalorder %s15, 0
    %p54 = por %p52, %p53
    %s55 = ssub.s32 %s17, %s24
    %p56 = scmp.eq.s32.totalorder %s55, 0
    %s58 = sadd.s32 %s57, 1
    %s59 = scalar_select %p56, %s57, %s58
    %p62 = pneg %p56
    %p63 = scmp.eq.s32.totalorder %s9, 7
    %p64 = por %p62, %p63
    %p65 = scmp.ne.s32.totalorder %s57, %s60
    %p66 = scmp.eq.s32.totalorder %s9, 0
    %p67 = por %p65, %p66
    %p68 = scmp.ne.s32.totalorder %s57, %s60
    %p69 = scmp.eq.s32.totalorder %s14, 7
    %p70 = por %p68, %p69
    %p71 = scmp.ne.s32.totalorder %s60, %s61
    %p72 = scmp.eq.s32.totalorder %s14, 0
    %p73 = por %p71, %p72
    %p74 = scmp.ne.s32.totalorder %s60, %s61
    %p75 = scmp.eq.s32.totalorder %s15, 7
    %p76 = por %p74, %p75
    %p78 = scmp.ne.s32.totalorder %s61, %s77
    %p79 = scmp.eq.s32.totalorder %s15, 0
    %p80 = por %p78, %p79
    %s81 = ssub.s32 %s17, %s24
    %p82 = scmp.eq.s32.totalorder %s81, 0
    %s84 = sadd.s32 %s83, 1
    %s85 = scalar_select %p82, %s83, %s84
    %p88 = pneg %p82
    %p89 = scmp.eq.s32.totalorder %s9, 7
    %p90 = por %p88, %p89
    %p91 = scmp.ne.s32.totalorder %s83, %s86
    %p92 = scmp.eq.s32.totalorder %s9, 0
    %p93 = por %p91, %p92
    %p94 = scmp.ne.s32.totalorder %s83, %s86
    %p95 = scmp.eq.s32.totalorder %s14, 7
    %p96 = por %p94, %p95
    %p97 = scmp.ne.s32.totalorder %s86, %s87
    %p98 = scmp.eq.s32.totalorder %s14, 0
    %p99 = por %p97, %p98
    %p100 = scmp.ne.s32.totalorder %s86, %s87
    %p101 = scmp.eq.s32.totalorder %s15, 7
    %p102 = por %p100, %p101
    %p104 = scmp.ne.s32.totalorder %s87, %s103
    %p105 = scmp.eq.s32.totalorder %s15, 0
    %p106 = por %p104, %p105
    %s107 = ssub.s32 %s16, %s28
    %s108 = ssub.s32 %s17, %s24
    %s109 = sor.u32 %s107, %s108
    %p110 = scmp.eq.s32.totalorder %s109, 0
    %s112 = sadd.s32 %s111, 1
    %s113 = scalar_select %p110, %s111, %s112
    %p116 = pneg %p110
    %p117 = scmp.eq.s32.totalorder %s9, 7
    %p118 = por %p116, %p117
    %p119 = scmp.ne.s32.totalorder %s111, %s114
    %p120 = scmp.eq.s32.totalorder %s9, 0
    %p121 = por %p119, %p120
    %p122 = scmp.ne.s32.totalorder %s111, %s114
    %p123 = scmp.eq.s32.totalorder %s14, 7
    %p124 = por %p122, %p123
    %p125 = scmp.ne.s32.totalorder %s114, %s115
    %p126 = scmp.eq.s32.totalorder %s14, 0
    %p127 = por %p125, %p126
    %p128 = scmp.ne.s32.totalorder %s114, %s115
    %p129 = scmp.eq.s32.totalorder %s15, 7
    %p130 = por %p128, %p129
    %p132 = scmp.ne.s32.totalorder %s115, %s131
    %p133 = scmp.eq.s32.totalorder %s15, 0
    %p134 = por %p132, %p133
    %p135 = scmp.le.s32.totalorder 1, %s9
    %p136 = scmp.lt.s32.totalorder %s9, 9
    %p137 = pnand %p135, %p136
    %p138 = pneg %p137
    // Predicated region
    $region9: #{tpu_custom_call.1} parent=5 // pred_check
      _
    $region10: #{tpu_custom_call.1} parent=5 // pred_check_branch
      %140 = sbr.rel (%p137) target = $region12
    $region11: #{tpu_custom_call.1} parent=5 // pred_region
      %s141 = ssub.s32 %s9, 1
      // Predicated region
      $region13: #{tpu_custom_call.1} parent=11 // pred_check
        %p142 = pneg %p73
      $region14: #{tpu_custom_call.1} parent=11 // pred_check_branch
        %144 = sbr.rel (%p142) target = $region16
      $region15: #{tpu_custom_call.1} parent=11 // pred_region
        %p145 = scmp.lt.s32.totalorder %s19, 0
        %s146 = scalar_select %p145, %s19, 0
        %s147 = smul.addr %s146, 4
        %s148 = scalar_lea.vmem %s1, %s147
      $region16: #{tpu_custom_call.1} parent=11 // pred_fallthru
        _
      // Predicated region
      $region17: #{tpu_custom_call.1} parent=11 // pred_check
        %p149 = pneg %p99
      $region18: #{tpu_custom_call.1} parent=11 // pred_check_branch
        %151 = sbr.rel (%p149) target = $region20
      $region19: #{tpu_custom_call.1} parent=11 // pred_region
        %p152 = scmp.lt.s32.totalorder %s19, 0
        %s153 = scalar_select %p152, %s19, 0
        %s154 = scalar_lea.vmem %s2, %s153
      $region20: #{tpu_custom_call.1} parent=11 // pred_fallthru
        _
    $region12: #{tpu_custom_call.1} parent=5 // pred_fallthru
      _
    %p155 = scmp.lt.s32.totalorder %s9, 8
    // Predicated region
    $region21: #{tpu_custom_call.1} parent=5 // pred_check
      %p156 = pneg %p155
    $region22: #{tpu_custom_call.1} parent=5 // pred_check_branch
      %158 = sbr.rel (%p156) target = $region24
    $region23: #{tpu_custom_call.1} parent=5 // pred_region
      // Predicated region
      $region25: #{tpu_custom_call.1} parent=23 // pred_check
        %p159 = pneg %p41
      $region26: #{tpu_custom_call.1} parent=23 // pred_check_branch
        %161 = sbr.rel (%p159) target = $region28
      $region27: #{tpu_custom_call.1} parent=23 // pred_region
        %s162 = smul.u32 32, %s16
        %p163 = scmp.lt.s32.totalorder %s162, 255
        %s164 = scalar_select %p163, %s162, 255
        %s165 = smul.addr %s164, 2
        %s166 = smul.addr %s165, 4
        %s167 = scalar_lea.vmem %s0, %s166
        %s168 = smul.u32 32, %s16
      $region28: #{tpu_custom_call.1} parent=23 // pred_fallthru
        _
    $region24: #{tpu_custom_call.1} parent=5 // pred_fallthru
      _
    %p169 = scmp.le.s32.totalorder 1, %s9
    %p170 = scmp.lt.s32.totalorder %s9, 9
    %p171 = pnand %p169, %p170
    %p172 = pneg %p171
    // Predicated region
    $region29: #{tpu_custom_call.1} parent=5 // pred_check
      _
    $region30: #{tpu_custom_call.1} parent=5 // pred_check_branch
      %174 = sbr.rel (%p171) target = $region32
    $region31: #{tpu_custom_call.1} parent=5 // pred_region
      %s175 = ssub.s32 %s9, 1
      %s176 = smul.u32 32, %s18
      %p177 = scmp.lt.s32.totalorder %s176, 255
      %s178 = scalar_select %p177, %s176, 255
      %s179 = smul.addr %s178, 2
      %s180 = smul.addr %s179, 4
      %s181 = scalar_lea.vmem %s0, %s180
      %p182 = pneg %p47
      %p183 = pneg %p44
      %p184 = scmp.lt.s32.totalorder %s19, 0
      %s185 = scalar_select %p184, %s19, 0
      %s186 = smul.addr %s185, 4
      %s187 = scalar_lea.vmem %s1, %s186
      %p188 = pneg %p73
      %p189 = pneg %p70
      %p190 = scmp.lt.s32.totalorder %s19, 0
      %s191 = scalar_select %p190, %s19, 0
      %s192 = scalar_lea.vmem %s2, %s191
      %p193 = pneg %p99
      %p194 = pneg %p96
      %p195 = pneg %p127
      %p196 = pneg %p124
      %s197 = smul.u32 32, %s18
      %p198 = scmp.lt.s32.totalorder %s197, 255
      %s199 = scalar_select %p198, %s197, 255
      %p200 = scmp.lt.s32.totalorder %s19, 0
      %s201 = scalar_select %p200, %s19, 0
      %s202 = sadd.s32 %s201, %s199
      %s203 = smul.addr %s202, 4
      %s204 = scalar_lea.vmem %s3, %s203
      %s205 = smul.u32 32, %s18
      %p206 = scmp.lt.s32.totalorder %s205, 255
      %s207 = scalar_select %p206, %s205, 255
      %s208 = smul.addr %s207, 2
      %s209 = smul.addr %s208, 4
      %s210 = scalar_lea.vmem %s0, %s209
      %s211 = smul.u32 32, %s18
      %p212 = scmp.lt.s32.totalorder %s19, 0
      %s213 = scalar_select %p212, %s19, 0
      %s214 = smul.addr %s213, 4
      %s215 = scalar_lea.vmem %s1, %s214
      %p216 = scmp.lt.s32.totalorder %s19, 0
      %s217 = scalar_select %p216, %s19, 0
      %s218 = scalar_lea.vmem %s2, %s217
      %s219 = smul.u32 32, %s18
      %p220 = scmp.lt.s32.totalorder %s219, 255
      %s221 = scalar_select %p220, %s219, 255
      %p222 = scmp.lt.s32.totalorder %s19, 0
      %s223 = scalar_select %p222, %s19, 0
      %s224 = sadd.s32 %s223, %s221
      %s225 = smul.addr %s224, 4
      %s226 = scalar_lea.vmem %s3, %s225
      %s227 = smul.u32 32, %s18
      %v229 = vld [vmem:[%s210] sm:$0xff]
      %v230 = vld [vmem:[%s210 + $0x8] sm:$0xff]
      %v231 = vld [vmem:[%s210 + $0x10] sm:$0xff]
      %v232 = vld [vmem:[%s210 + $0x18] sm:$0xff]
      %v233 = vld [vmem:[%s210 + $0x20] sm:$0xff]
      %v234 = vld [vmem:[%s210 + $0x28] sm:$0xff]
      %v235 = vld [vmem:[%s210 + $0x30] sm:$0xff]
      %v236 = vld [vmem:[%s210 + $0x38] sm:$0xff]
      %v237 = vld [vmem:[%s210 + $0x40] sm:$0xff]
      %v238 = vld [vmem:[%s210 + $0x48] sm:$0xff]
      %v239 = vld [vmem:[%s210 + $0x50] sm:$0xff]
      %v240 = vld [vmem:[%s210 + $0x58] sm:$0xff]
      %v241 = vld [vmem:[%s210 + $0x60] sm:$0xff]
      %v242 = vld [vmem:[%s210 + $0x68] sm:$0xff]
      %v243 = vld [vmem:[%s210 + $0x70] sm:$0xff]
      %v244 = vld [vmem:[%s210 + $0x78] sm:$0xff]
      %v245 = vld [vmem:[%s210 + $0x80] sm:$0xff]
      %v246 = vld [vmem:[%s210 + $0x88] sm:$0xff]
      %v247 = vld [vmem:[%s210 + $0x90] sm:$0xff]
      %v248 = vld [vmem:[%s210 + $0x98] sm:$0xff]
      %v249 = vld [vmem:[%s210 + $0xa0] sm:$0xff]
      %v250 = vld [vmem:[%s210 + $0xa8] sm:$0xff]
      %v251 = vld [vmem:[%s210 + $0xb0] sm:$0xff]
      %v252 = vld [vmem:[%s210 + $0xb8] sm:$0xff]
      %v253 = vld [vmem:[%s210 + $0xc0] sm:$0xff]
      %v254 = vld [vmem:[%s210 + $0xc8] sm:$0xff]
      %v255 = vld [vmem:[%s210 + $0xd0] sm:$0xff]
      %v256 = vld [vmem:[%s210 + $0xd8] sm:$0xff]
      %v257 = vld [vmem:[%s210 + $0xe0] sm:$0xff]
      %v258 = vld [vmem:[%s210 + $0xe8] sm:$0xff]
      %v259 = vld [vmem:[%s210 + $0xf0] sm:$0xff]
      %v260 = vld [vmem:[%s210 + $0xf8] sm:$0xff]
      %v261 = vld [vmem:[%s215] sm:$0xf]
      %v262 = vld [vmem:[%s215 + $0x4] sm:$0xf]
      %v263 = vld [vmem:[%s215 + $0x8] sm:$0xf]
      %v264 = vld [vmem:[%s215 + $0xc] sm:$0xf]
      %v265 = vld [vmem:[%s215 + $0x10] sm:$0xf]
      %v266 = vld [vmem:[%s215 + $0x14] sm:$0xf]
      %v267 = vld [vmem:[%s215 + $0x18] sm:$0xf]
      %v268 = vld [vmem:[%s215 + $0x1c] sm:$0xf]
      %v269 = vld [vmem:[%s215 + $0x20] sm:$0xf]
      %v270 = vld [vmem:[%s215 + $0x24] sm:$0xf]
      %v271 = vld [vmem:[%s215 + $0x28] sm:$0xf]
      %v272 = vld [vmem:[%s215 + $0x2c] sm:$0xf]
      %v273 = vld [vmem:[%s215 + $0x30] sm:$0xf]
      %v274 = vld [vmem:[%s215 + $0x34] sm:$0xf]
      %v275 = vld [vmem:[%s215 + $0x38] sm:$0xf]
      %v276 = vld [vmem:[%s215 + $0x3c] sm:$0xf]
      %v277 = vld [vmem:[%s215 + $0x40] sm:$0xf]
      %v278 = vld [vmem:[%s215 + $0x44] sm:$0xf]
      %v279 = vld [vmem:[%s215 + $0x48] sm:$0x3]
      %v280 = vld [vmem:[%s218] sm:$0x1]
      %v282 = vlaneseq
      %v283 = vshrl.u32 %v282, 7
      %v284 = vsub.s32 0, %v283
      %v285 = vrot.slane %v280, %v284
      %v319 = vunpack.c.l.b16 %v229
      %v320 = vunpack.c.h.b16 %v229
      %v321 = vunpack.c.l.b16 %v230
      %v322 = vunpack.c.h.b16 %v230
      %v323 = vunpack.c.l.b16 %v231
      %v324 = vunpack.c.h.b16 %v231
      %v325 = vunpack.c.l.b16 %v232
      %v326 = vunpack.c.h.b16 %v232
      %v327 = vunpack.c.l.b16 %v233
      %v328 = vunpack.c.h.b16 %v233
      %v329 = vunpack.c.l.b16 %v234
      %v330 = vunpack.c.h.b16 %v234
      %v331 = vunpack.c.l.b16 %v235
      %v332 = vunpack.c.h.b16 %v235
      %v333 = vunpack.c.l.b16 %v236
      %v334 = vunpack.c.h.b16 %v236
      %v335 = vunpack.c.l.b16 %v237
      %v336 = vunpack.c.h.b16 %v237
      %v337 = vunpack.c.l.b16 %v238
      %v338 = vunpack.c.h.b16 %v238
      %v339 = vunpack.c.l.b16 %v239
      %v340 = vunpack.c.h.b16 %v239
      %v341 = vunpack.c.l.b16 %v240
      %v342 = vunpack.c.h.b16 %v240
      %v343 = vunpack.c.l.b16 %v241
      %v344 = vunpack.c.h.b16 %v241
      %v345 = vunpack.c.l.b16 %v242
      %v346 = vunpack.c.h.b16 %v242
      %v347 = vunpack.c.l.b16 %v243
      %v348 = vunpack.c.h.b16 %v243
      %v349 = vunpack.c.l.b16 %v244
      %v350 = vunpack.c.h.b16 %v244
      %v351 = vunpack.c.l.b16 %v245
      %v352 = vunpack.c.h.b16 %v245
      %v353 = vunpack.c.l.b16 %v246
      %v354 = vunpack.c.h.b16 %v246
      %v355 = vunpack.c.l.b16 %v247
      %v356 = vunpack.c.h.b16 %v247
      %v357 = vunpack.c.l.b16 %v248
      %v358 = vunpack.c.h.b16 %v248
      %v359 = vunpack.c.l.b16 %v249
      %v360 = vunpack.c.h.b16 %v249
      %v361 = vunpack.c.l.b16 %v250
      %v362 = vunpack.c.h.b16 %v250
      %v363 = vunpack.c.l.b16 %v251
      %v364 = vunpack.c.h.b16 %v251
      %v365 = vunpack.c.l.b16 %v252
      %v366 = vunpack.c.h.b16 %v252
      %v367 = vunpack.c.l.b16 %v253
      %v368 = vunpack.c.h.b16 %v253
      %v369 = vunpack.c.l.b16 %v254
      %v370 = vunpack.c.h.b16 %v254
      %v371 = vunpack.c.l.b16 %v255
      %v372 = vunpack.c.h.b16 %v255
      %v373 = vunpack.c.l.b16 %v256
      %v374 = vunpack.c.h.b16 %v256
      %v375 = vunpack.c.l.b16 %v257
      %v376 = vunpack.c.h.b16 %v257
      %v377 = vunpack.c.l.b16 %v258
      %v378 = vunpack.c.h.b16 %v258
      %v379 = vunpack.c.l.b16 %v259
      %v380 = vunpack.c.h.b16 %v259
      %v381 = vunpack.c.l.b16 %v260
      %v382 = vunpack.c.h.b16 %v260
      %v383 = vpack.c.b16 %v321, %v319
      %v384 = vpack.c.b16 %v322, %v320
      %v385 = vpack.c.b16 %v325, %v323
      %v386 = vpack.c.b16 %v326, %v324
      %v387 = vpack.c.b16 %v329, %v327
      %v388 = vpack.c.b16 %v330, %v328
      %v389 = vpack.c.b16 %v333, %v331
      %v390 = vpack.c.b16 %v334, %v332
      %v391 = vpack.c.b16 %v337, %v335
      %v392 = vpack.c.b16 %v338, %v336
      %v393 = vpack.c.b16 %v341, %v339
      %v394 = vpack.c.b16 %v342, %v340
      %v395 = vpack.c.b16 %v345, %v343
      %v396 = vpack.c.b16 %v346, %v344
      %v397 = vpack.c.b16 %v349, %v347
      %v398 = vpack.c.b16 %v350, %v348
      %v399 = vpack.c.b16 %v353, %v351
      %v400 = vpack.c.b16 %v354, %v352
      %v401 = vpack.c.b16 %v357, %v355
      %v402 = vpack.c.b16 %v358, %v356
      %v403 = vpack.c.b16 %v361, %v359
      %v404 = vpack.c.b16 %v362, %v360
      %v405 = vpack.c.b16 %v365, %v363
      %v406 = vpack.c.b16 %v366, %v364
      %v407 = vpack.c.b16 %v369, %v367
      %v408 = vpack.c.b16 %v370, %v368
      %v409 = vpack.c.b16 %v373, %v371
      %v410 = vpack.c.b16 %v374, %v372
      %v411 = vpack.c.b16 %v377, %v375
      %v412 = vpack.c.b16 %v378, %v376
      %v413 = vpack.c.b16 %v381, %v379
      %v414 = vpack.c.b16 %v382, %v380
      %v450 = vunpack.c.l.b16 %v261
      %v451 = vunpack.c.l.b16 %v262
      %v452 = vunpack.c.l.b16 %v263
      %v453 = vunpack.c.l.b16 %v264
      %v454 = vunpack.c.l.b16 %v265
      %v455 = vunpack.c.l.b16 %v266
      %v456 = vunpack.c.l.b16 %v267
      %v457 = vunpack.c.l.b16 %v268
      %v458 = vunpack.c.l.b16 %v269
      %v459 = vunpack.c.l.b16 %v270
      %v460 = vunpack.c.l.b16 %v271
      %v461 = vunpack.c.l.b16 %v272
      %v462 = vunpack.c.l.b16 %v273
      %v463 = vunpack.c.l.b16 %v274
      %v464 = vunpack.c.l.b16 %v275
      %v465 = vunpack.c.l.b16 %v276
      %v466 = vunpack.c.l.b16 %v277
      %v467 = vunpack.c.l.b16 %v278
      %v468 = vunpack.c.l.b16 %v279
      %v469 = vpack.c.b16 %v451, %v450
      %v470 = vpack.c.b16 %v453, %v452
      %v471 = vpack.c.b16 %v455, %v454
      %v472 = vpack.c.b16 %v457, %v456
      %v473 = vpack.c.b16 %v459, %v458
      %v474 = vpack.c.b16 %v461, %v460
      %v475 = vpack.c.b16 %v463, %v462
      %v476 = vpack.c.b16 %v465, %v464
      %v477 = vpack.c.b16 %v467, %v466
      %v478 = vpack.c.b16 %v468, %v468
      %vm488 = vcmask 154624
      %v490 = vsel %vm488, %v384, 0
      %v493 = vsel %vm488, %v386, 0
      %v496 = vsel %vm488, %v388, 0
      %v499 = vsel %vm488, %v390, 0
      %v502 = vsel %vm488, %v392, 0
      %v505 = vsel %vm488, %v394, 0
      %v508 = vsel %vm488, %v396, 0
      %v511 = vsel %vm488, %v398, 0
      %v514 = vsel %vm488, %v400, 0
      %v517 = vsel %vm488, %v402, 0
      %v520 = vsel %vm488, %v404, 0
      %v523 = vsel %vm488, %v406, 0
      %v526 = vsel %vm488, %v408, 0
      %v529 = vsel %vm488, %v410, 0
      %v532 = vsel %vm488, %v412, 0
      %v535 = vsel %vm488, %v414, 0
      %vm537 = vcmask 1040384
      %vm538 = vcmask 1041408
      %v539 = vsel %vm537, 4294967295, 65535
      %v540 = vsel %vm538, %v539, 0
      %v542 = vand.u32 %v478, %v540
      %544 = vmatprep.subr.bf16.mxu0 0
      %545 = vmatpush1.bf16.msra.mxu0 %v469
      %546 = vmatprep.subr.bf16.mxu0 0
      %547 = vmatpush1.bf16.msra.mxu0 %v470
      %548 = vmatprep.subr.bf16.mxu0 0
      %549 = vmatpush1.bf16.msra.mxu0 %v471
      %550 = vmatprep.subr.bf16.mxu0 0
      %551 = vmatpush1.bf16.msra.mxu0 %v472
      %552 = vmatprep.subr.bf16.mxu0 0
      %553 = vmatpush1.bf16.msra.mxu0 %v473
      %554 = vmatprep.subr.bf16.mxu0 0
      %555 = vmatpush1.bf16.msra.mxu0 %v474
      %556 = vmatprep.subr.bf16.mxu0 0
      %557 = vmatpush1.bf16.msra.mxu0 %v475
      %558 = vmatprep.subr.bf16.mxu0 0
      %559 = vmatpush1.bf16.msra.mxu0 %v476
      %560 = vmatprep.subr.bf16.mxu0 0
      %561 = vmatpush1.bf16.msra.mxu0 %v477
      %562 = vmatprep.subr.bf16.mxu0 0
      %563 = vmatpush1.bf16.msra.mxu0 %v542
      %564 = vmatprep.subr.bf16.mxu0 0
      %565 = vmatpush1.bf16.msra.mxu0 0
      %566 = vmatprep.subr.bf16.mxu0 0
      %567 = vmatpush1.bf16.msra.mxu0 0
      %568 = vmatprep.subr.bf16.mxu0 0
      %569 = vmatpush1.bf16.msra.mxu0 0
      %570 = vmatprep.subr.bf16.mxu0 0
      %571 = vmatpush1.bf16.msra.mxu0 0
      %572 = vmatprep.subr.bf16.mxu0 0
      %573 = vmatpush1.bf16.msra.mxu0 0
      %574 = vmatprep.subr.bf16.mxu0 0
      %575 = vmatpush1.bf16.msra.mxu0 0
      %576 = vmatprep.mubr.bf16.mxu0 %v490
      %577 = vmatmul.mubr.bf16.gmra.mrb[0].mxu0 %v383
      %v578 = vpop.f32.mrb[0].mxu0
      %v579 = vadd.f32 %v285, %v578
      %v580 = vpop.f32.mrb[0].mxu0
      %v581 = vpop.f32.mrb[0].mxu0
      %v582 = vadd.f32 %v285, %v581
      %v583 = vpop.f32.mrb[0].mxu0
      %584 = vmatprep.mubr.bf16.mxu0 %v493
      %585 = vmatmul.mubr.bf16.gmra.mrb[0].mxu0 %v385
      %v586 = vpop.f32.mrb[0].mxu0
      %v587 = vadd.f32 %v285, %v586
      %v588 = vpop.f32.mrb[0].mxu0
      %v589 = vpop.f32.mrb[0].mxu0
      %v590 = vadd.f32 %v285, %v589
      %v591 = vpop.f32.mrb[0].mxu0
      %592 = vmatprep.mubr.bf16.mxu0 %v496
      %593 = vmatmul.mubr.bf16.gmra.mrb[0].mxu0 %v387
      %v594 = vpop.f32.mrb[0].mxu0
      %v595 = vadd.f32 %v285, %v594
      %v596 = vpop.f32.mrb[0].mxu0
      %v597 = vpop.f32.mrb[0].mxu0
      %v598 = vadd.f32 %v285, %v597
      %v599 = vpop.f32.mrb[0].mxu0
      %600 = vmatprep.mubr.bf16.mxu0 %v499
      %601 = vmatmul.mubr.bf16.gmra.mrb[0].mxu0 %v389
      %v602 = vpop.f32.mrb[0].mxu0
      %v603 = vadd.f32 %v285, %v602
      %v604 = vpop.f32.mrb[0].mxu0
      %v605 = vpop.f32.mrb[0].mxu0
      %v606 = vadd.f32 %v285, %v605
      %v607 = vpop.f32.mrb[0].mxu0
      %608 = vmatprep.mubr.bf16.mxu0 %v502
      %609 = vmatmul.mubr.bf16.gmra.mrb[0].mxu0 %v391
      %v610 = vpop.f32.mrb[0].mxu0
      %v611 = vadd.f32 %v285, %v610
      %v612 = vpop.f32.mrb[0].mxu0
      %v613 = vpop.f32.mrb[0].mxu0
      %v614 = vadd.f32 %v285, %v613
      %v615 = vpop.f32.mrb[0].mxu0
      %616 = vmatprep.mubr.bf16.mxu0 %v505
      %617 = vmatmul.mubr.bf16.gmra.mrb[0].mxu0 %v393
      %v618 = vpop.f32.mrb[0].mxu0
      %v619 = vadd.f32 %v285, %v618
      %v620 = vpop.f32.mrb[0].mxu0
      %v621 = vpop.f32.mrb[0].mxu0
      %v622 = vadd.f32 %v285, %v621
      %v623 = vpop.f32.mrb[0].mxu0
      %624 = vmatprep.mubr.bf16.mxu0 %v508
      %625 = vmatmul.mubr.bf16.gmra.mrb[0].mxu0 %v395
      %v626 = vpop.f32.mrb[0].mxu0
      %v627 = vadd.f32 %v285, %v626
      %v628 = vpop.f32.mrb[0].mxu0
      %v629 = vpop.f32.mrb[0].mxu0
      %v630 = vadd.f32 %v285, %v629
      %v631 = vpop.f32.mrb[0].mxu0
      %632 = vmatprep.mubr.bf16.mxu0 %v511
      %633 = vmatmul.mubr.bf16.gmra.mrb[0].mxu0 %v397
      %v634 = vpop.f32.mrb[0].mxu0
      %v635 = vadd.f32 %v285, %v634
      %v636 = vpop.f32.mrb[0].mxu0
      %v637 = vpop.f32.mrb[0].mxu0
      %v638 = vadd.f32 %v285, %v637
      %v639 = vpop.f32.mrb[0].mxu0
      %640 = vmatprep.mubr.bf16.mxu0 %v514
      %641 = vmatmul.mubr.bf16.gmra.mrb[0].mxu0 %v399
      %v642 = vpop.f32.mrb[0].mxu0
      %v643 = vadd.f32 %v285, %v642
      %v644 = vpop.f32.mrb[0].mxu0
      %v645 = vpop.f32.mrb[0].mxu0
      %v646 = vadd.f32 %v285, %v645
      %v647 = vpop.f32.mrb[0].mxu0
      %648 = vmatprep.mubr.bf16.mxu0 %v517
      %649 = vmatmul.mubr.bf16.gmra.mrb[0].mxu0 %v401
      %v650 = vpop.f32.mrb[0].mxu0
      %v651 = vadd.f32 %v285, %v650
      %v652 = vpop.f32.mrb[0].mxu0
      %v653 = vpop.f32.mrb[0].mxu0
      %v654 = vadd.f32 %v285, %v653
      %v655 = vpop.f32.mrb[0].mxu0
      %656 = vmatprep.mubr.bf16.mxu0 %v520
      %657 = vmatmul.mubr.bf16.gmra.mrb[0].mxu0 %v403
      %v658 = vpop.f32.mrb[0].mxu0
      %v659 = vadd.f32 %v285, %v658
      %v660 = vpop.f32.mrb[0].mxu0
      %v661 = vpop.f32.mrb[0].mxu0
      %v662 = vadd.f32 %v285, %v661
      %v663 = vpop.f32.mrb[0].mxu0
      %664 = vmatprep.mubr.bf16.mxu0 %v523
      %665 = vmatmul.mubr.bf16.gmra.mrb[0].mxu0 %v405
      %v666 = vpop.f32.mrb[0].mxu0
      %v667 = vadd.f32 %v285, %v666
      %v668 = vpop.f32.mrb[0].mxu0
      %v669 = vpop.f32.mrb[0].mxu0
      %v670 = vadd.f32 %v285, %v669
      %v671 = vpop.f32.mrb[0].mxu0
      %672 = vmatprep.mubr.bf16.mxu0 %v526
      %673 = vmatmul.mubr.bf16.gmra.mrb[0].mxu0 %v407
      %v674 = vpop.f32.mrb[0].mxu0
      %v675 = vadd.f32 %v285, %v674
      %v676 = vpop.f32.mrb[0].mxu0
      %v677 = vpop.f32.mrb[0].mxu0
      %v678 = vadd.f32 %v285, %v677
      %v679 = vpop.f32.mrb[0].mxu0
      %680 = vmatprep.mubr.bf16.mxu0 %v529
      %681 = vmatmul.mubr.bf16.gmra.mrb[0].mxu0 %v409
      %v682 = vpop.f32.mrb[0].mxu0
      %v683 = vadd.f32 %v285, %v682
      %v684 = vpop.f32.mrb[0].mxu0
      %v685 = vpop.f32.mrb[0].mxu0
      %v686 = vadd.f32 %v285, %v685
      %v687 = vpop.f32.mrb[0].mxu0
      %688 = vmatprep.mubr.bf16.mxu0 %v532
      %689 = vmatmul.mubr.bf16.gmra.mrb[0].mxu0 %v411
      %v690 = vpop.f32.mrb[0].mxu0
      %v691 = vadd.f32 %v285, %v690
      %v692 = vpop.f32.mrb[0].mxu0
      %v693 = vpop.f32.mrb[0].mxu0
      %v694 = vadd.f32 %v285, %v693
      %v695 = vpop.f32.mrb[0].mxu0
      %696 = vmatprep.mubr.bf16.mxu0 %v535
      %697 = vmatmul.mubr.bf16.gmra.mrb[0].mxu0 %v413
      %v698 = vpop.f32.mrb[0].mxu0
      %v699 = vadd.f32 %v285, %v698
      %v700 = vpop.f32.mrb[0].mxu0
      %v701 = vpop.f32.mrb[0].mxu0
      %v702 = vadd.f32 %v285, %v701
      %v703 = vpop.f32.mrb[0].mxu0
      %704 = vdwg.mxu0
      %vm705 = vcmp.ge.f32.partialorder %v579, 0.0
      %vm706 = vcmp.ge.f32.partialorder %v582, 0.0
      %vm707 = vcmp.ge.f32.partialorder %v587, 0.0
      %vm708 = vcmp.ge.f32.partialorder %v590, 0.0
      %vm709 = vcmp.ge.f32.partialorder %v595, 0.0
      %vm710 = vcmp.ge.f32.partialorder %v598, 0.0
      %vm711 = vcmp.ge.f32.partialorder %v603, 0.0
      %vm712 = vcmp.ge.f32.partialorder %v606, 0.0
      %vm713 = vcmp.ge.f32.partialorder %v611, 0.0
      %vm714 = vcmp.ge.f32.partialorder %v614, 0.0
      %vm715 = vcmp.ge.f32.partialorder %v619, 0.0
      %vm716 = vcmp.ge.f32.partialorder %v622, 0.0
      %vm717 = vcmp.ge.f32.partialorder %v627, 0.0
      %vm718 = vcmp.ge.f32.partialorder %v630, 0.0
      %vm719 = vcmp.ge.f32.partialorder %v635, 0.0
      %vm720 = vcmp.ge.f32.partialorder %v638, 0.0
      %vm721 = vcmp.ge.f32.partialorder %v643, 0.0
      %vm722 = vcmp.ge.f32.partialorder %v646, 0.0
      %vm723 = vcmp.ge.f32.partialorder %v651, 0.0
      %vm724 = vcmp.ge.f32.partialorder %v654, 0.0
      %vm725 = vcmp.ge.f32.partialorder %v659, 0.0
      %vm726 = vcmp.ge.f32.partialorder %v662, 0.0
      %vm727 = vcmp.ge.f32.partialorder %v667, 0.0
      %vm728 = vcmp.ge.f32.partialorder %v670, 0.0
      %vm729 = vcmp.ge.f32.partialorder %v675, 0.0
      %vm730 = vcmp.ge.f32.partialorder %v678, 0.0
      %vm731 = vcmp.ge.f32.partialorder %v683, 0.0
      %vm732 = vcmp.ge.f32.partialorder %v686, 0.0
      %vm733 = vcmp.ge.f32.partialorder %v691, 0.0
      %vm734 = vcmp.ge.f32.partialorder %v694, 0.0
      %vm735 = vcmp.ge.f32.partialorder %v699, 0.0
      %vm736 = vcmp.ge.f32.partialorder %v702, 0.0
      %v737 = vmul.f32 %v579, 0.2
      %v738 = vmul.f32 %v582, 0.2
      %v739 = vmul.f32 %v587, 0.2
      %v740 = vmul.f32 %v590, 0.2
      %v741 = vmul.f32 %v595, 0.2
      %v742 = vmul.f32 %v598, 0.2
      %v743 = vmul.f32 %v603, 0.2
      %v744 = vmul.f32 %v606, 0.2
      %v745 = vmul.f32 %v611, 0.2
      %v746 = vmul.f32 %v614, 0.2
      %v747 = vmul.f32 %v619, 0.2
      %v748 = vmul.f32 %v622, 0.2
      %v749 = vmul.f32 %v627, 0.2
      %v750 = vmul.f32 %v630, 0.2
      %v751 = vmul.f32 %v635, 0.2
      %v752 = vmul.f32 %v638, 0.2
      %v753 = vmul.f32 %v643, 0.2
      %v754 = vmul.f32 %v646, 0.2
      %v755 = vmul.f32 %v651, 0.2
      %v756 = vmul.f32 %v654, 0.2
      %v757 = vmul.f32 %v659, 0.2
      %v758 = vmul.f32 %v662, 0.2
      %v759 = vmul.f32 %v667, 0.2
      %v760 = vmul.f32 %v670, 0.2
      %v761 = vmul.f32 %v675, 0.2
      %v762 = vmul.f32 %v678, 0.2
      %v763 = vmul.f32 %v683, 0.2
      %v764 = vmul.f32 %v686, 0.2
      %v765 = vmul.f32 %v691, 0.2
      %v766 = vmul.f32 %v694, 0.2
      %v767 = vmul.f32 %v699, 0.2
      %v768 = vmul.f32 %v702, 0.2
      %v769 = vsel %vm705, %v579, %v737
      %v770 = vsel %vm706, %v582, %v738
      %v771 = vsel %vm707, %v587, %v739
      %v772 = vsel %vm708, %v590, %v740
      %v773 = vsel %vm709, %v595, %v741
      %v774 = vsel %vm710, %v598, %v742
      %v775 = vsel %vm711, %v603, %v743
      %v776 = vsel %vm712, %v606, %v744
      %v777 = vsel %vm713, %v611, %v745
      %v778 = vsel %vm714, %v614, %v746
      %v779 = vsel %vm715, %v619, %v747
      %v780 = vsel %vm716, %v622, %v748
      %v781 = vsel %vm717, %v627, %v749
      %v782 = vsel %vm718, %v630, %v750
      %v783 = vsel %vm719, %v635, %v751
      %v784 = vsel %vm720, %v638, %v752
      %v785 = vsel %vm721, %v643, %v753
      %v786 = vsel %vm722, %v646, %v754
      %v787 = vsel %vm723, %v651, %v755
      %v788 = vsel %vm724, %v654, %v756
      %v789 = vsel %vm725, %v659, %v757
      %v790 = vsel %vm726, %v662, %v758
      %v791 = vsel %vm727, %v667, %v759
      %v792 = vsel %vm728, %v670, %v760
      %v793 = vsel %vm729, %v675, %v761
      %v794 = vsel %vm730, %v678, %v762
      %v795 = vsel %vm731, %v683, %v763
      %v796 = vsel %vm732, %v686, %v764
      %v797 = vsel %vm733, %v691, %v765
      %v798 = vsel %vm734, %v694, %v766
      %v799 = vsel %vm735, %v699, %v767
      %v800 = vsel %vm736, %v702, %v768
      %v801 = vpack.c.bf16 %v770, %v769
      %v802 = vpack.c.bf16 %v772, %v771
      %v803 = vpack.c.bf16 %v774, %v773
      %v804 = vpack.c.bf16 %v776, %v775
      %v805 = vpack.c.bf16 %v778, %v777
      %v806 = vpack.c.bf16 %v780, %v779
      %v807 = vpack.c.bf16 %v782, %v781
      %v808 = vpack.c.bf16 %v784, %v783
      %v809 = vpack.c.bf16 %v786, %v785
      %v810 = vpack.c.bf16 %v788, %v787
      %v811 = vpack.c.bf16 %v790, %v789
      %v812 = vpack.c.bf16 %v792, %v791
      %v813 = vpack.c.bf16 %v794, %v793
      %v814 = vpack.c.bf16 %v796, %v795
      %v815 = vpack.c.bf16 %v798, %v797
      %v816 = vpack.c.bf16 %v800, %v799
      %v833 = vunpack.c.l.b16 %v801
      %v834 = vunpack.c.h.b16 %v801
      %v835 = vunpack.c.l.b16 %v802
      %v836 = vunpack.c.h.b16 %v802
      %v837 = vunpack.c.l.b16 %v803
      %v838 = vunpack.c.h.b16 %v803
      %v839 = vunpack.c.l.b16 %v804
      %v840 = vunpack.c.h.b16 %v804
      %v841 = vunpack.c.l.b16 %v805
      %v842 = vunpack.c.h.b16 %v805
      %v843 = vunpack.c.l.b16 %v806
      %v844 = vunpack.c.h.b16 %v806
      %v845 = vunpack.c.l.b16 %v807
      %v846 = vunpack.c.h.b16 %v807
      %v847 = vunpack.c.l.b16 %v808
      %v848 = vunpack.c.h.b16 %v808
      %v849 = vunpack.c.l.b16 %v809
      %v850 = vunpack.c.h.b16 %v809
      %v851 = vunpack.c.l.b16 %v810
      %v852 = vunpack.c.h.b16 %v810
      %v853 = vunpack.c.l.b16 %v811
      %v854 = vunpack.c.h.b16 %v811
      %v855 = vunpack.c.l.b16 %v812
      %v856 = vunpack.c.h.b16 %v812
      %v857 = vunpack.c.l.b16 %v813
      %v858 = vunpack.c.h.b16 %v813
      %v859 = vunpack.c.l.b16 %v814
      %v860 = vunpack.c.h.b16 %v814
      %v861 = vunpack.c.l.b16 %v815
      %v862 = vunpack.c.h.b16 %v815
      %v863 = vunpack.c.l.b16 %v816
      %v864 = vunpack.c.h.b16 %v816
      %v865 = vpack.c.b16 %v833, %v833
      %v866 = vpack.c.b16 %v834, %v834
      %v867 = vpack.c.b16 %v835, %v835
      %v868 = vpack.c.b16 %v836, %v836
      %v869 = vpack.c.b16 %v837, %v837
      %v870 = vpack.c.b16 %v838, %v838
      %v871 = vpack.c.b16 %v839, %v839
      %v872 = vpack.c.b16 %v840, %v840
      %v873 = vpack.c.b16 %v841, %v841
      %v874 = vpack.c.b16 %v842, %v842
      %v875 = vpack.c.b16 %v843, %v843
      %v876 = vpack.c.b16 %v844, %v844
      %v877 = vpack.c.b16 %v845, %v845
      %v878 = vpack.c.b16 %v846, %v846
      %v879 = vpack.c.b16 %v847, %v847
      %v880 = vpack.c.b16 %v848, %v848
      %v881 = vpack.c.b16 %v849, %v849
      %v882 = vpack.c.b16 %v850, %v850
      %v883 = vpack.c.b16 %v851, %v851
      %v884 = vpack.c.b16 %v852, %v852
      %v885 = vpack.c.b16 %v853, %v853
      %v886 = vpack.c.b16 %v854, %v854
      %v887 = vpack.c.b16 %v855, %v855
      %v888 = vpack.c.b16 %v856, %v856
      %v889 = vpack.c.b16 %v857, %v857
      %v890 = vpack.c.b16 %v858, %v858
      %v891 = vpack.c.b16 %v859, %v859
      %v892 = vpack.c.b16 %v860, %v860
      %v893 = vpack.c.b16 %v861, %v861
      %v894 = vpack.c.b16 %v862, %v862
      %v895 = vpack.c.b16 %v863, %v863
      %v896 = vpack.c.b16 %v864, %v864
      %vm929 = vcmask 519168
      %930 = vst.msk [vmem:[%s226] sm:$0xf] %vm929, %v865
      %931 = vst.msk [vmem:[%s226 + $0x4] sm:$0xf] %vm929, %v866
      %932 = vst.msk [vmem:[%s226 + $0x8] sm:$0xf] %vm929, %v867
      %933 = vst.msk [vmem:[%s226 + $0xc] sm:$0xf] %vm929, %v868
      %934 = vst.msk [vmem:[%s226 + $0x10] sm:$0xf] %vm929, %v869
      %935 = vst.msk [vmem:[%s226 + $0x14] sm:$0xf] %vm929, %v870
      %936 = vst.msk [vmem:[%s226 + $0x18] sm:$0xf] %vm929, %v871
      %937 = vst.msk [vmem:[%s226 + $0x1c] sm:$0xf] %vm929, %v872
      %938 = vst.msk [vmem:[%s226 + $0x20] sm:$0xf] %vm929, %v873
      %939 = vst.msk [vmem:[%s226 + $0x24] sm:$0xf] %vm929, %v874
      %940 = vst.msk [vmem:[%s226 + $0x28] sm:$0xf] %vm929, %v875
      %941 = vst.msk [vmem:[%s226 + $0x2c] sm:$0xf] %vm929, %v876
      %942 = vst.msk [vmem:[%s226 + $0x30] sm:$0xf] %vm929, %v877
      %943 = vst.msk [vmem:[%s226 + $0x34] sm:$0xf] %vm929, %v878
      %944 = vst.msk [vmem:[%s226 + $0x38] sm:$0xf] %vm929, %v879
      %945 = vst.msk [vmem:[%s226 + $0x3c] sm:$0xf] %vm929, %v880
      %946 = vst.msk [vmem:[%s226 + $0x40] sm:$0xf] %vm929, %v881
      %947 = vst.msk [vmem:[%s226 + $0x44] sm:$0xf] %vm929, %v882
      %948 = vst.msk [vmem:[%s226 + $0x48] sm:$0xf] %vm929, %v883
      %949 = vst.msk [vmem:[%s226 + $0x4c] sm:$0xf] %vm929, %v884
      %950 = vst.msk [vmem:[%s226 + $0x50] sm:$0xf] %vm929, %v885
      %951 = vst.msk [vmem:[%s226 + $0x54] sm:$0xf] %vm929, %v886
      %952 = vst.msk [vmem:[%s226 + $0x58] sm:$0xf] %vm929, %v887
      %953 = vst.msk [vmem:[%s226 + $0x5c] sm:$0xf] %vm929, %v888
      %954 = vst.msk [vmem:[%s226 + $0x60] sm:$0xf] %vm929, %v889
      %955 = vst.msk [vmem:[%s226 + $0x64] sm:$0xf] %vm929, %v890
      %956 = vst.msk [vmem:[%s226 + $0x68] sm:$0xf] %vm929, %v891
      %957 = vst.msk [vmem:[%s226 + $0x6c] sm:$0xf] %vm929, %v892
      %958 = vst.msk [vmem:[%s226 + $0x70] sm:$0xf] %vm929, %v893
      %959 = vst.msk [vmem:[%s226 + $0x74] sm:$0xf] %vm929, %v894
      %960 = vst.msk [vmem:[%s226 + $0x78] sm:$0xf] %vm929, %v895
      %961 = vst.msk [vmem:[%s226 + $0x7c] sm:$0xf] %vm929, %v896
      %s962 = smul.u32 32, %s18
      %p963 = scmp.lt.s32.totalorder %s962, 255
      %s964 = scalar_select %p963, %s962, 255
      %p965 = scmp.lt.s32.totalorder %s19, 0
      %s966 = scalar_select %p965, %s19, 0
      %s967 = sadd.s32 %s966, %s964
      %s968 = smul.addr %s967, 4
      %s969 = scalar_lea.vmem %s3, %s968
      // Predicated region
      $region33: #{tpu_custom_call.1} parent=31 // pred_check
        %p970 = pneg %p124
      $region34: #{tpu_custom_call.1} parent=31 // pred_check_branch
        %972 = sbr.rel (%p970) target = $region36
      $region35: #{tpu_custom_call.1} parent=31 // pred_region
        %s973 = smul.u32 32, %s18
      $region36: #{tpu_custom_call.1} parent=31 // pred_fallthru
        _
    $region32: #{tpu_custom_call.1} parent=5 // pred_fallthru
      _
    %p974 = scmp.le.s32.totalorder 2, %s9
    // Predicated region
    $region37: #{tpu_custom_call.1} parent=5 // pred_check
      %p975 = pneg %p974
    $region38: #{tpu_custom_call.1} parent=5 // pred_check_branch
      %977 = sbr.rel (%p975) target = $region40
    $region39: #{tpu_custom_call.1} parent=5 // pred_region
      %s978 = ssub.s32 %s9, 2
      // Predicated region
      $region41: #{tpu_custom_call.1} parent=39 // pred_check
        %p979 = pneg %p130
      $region42: #{tpu_custom_call.1} parent=39 // pred_check_branch
        %981 = sbr.rel (%p979) target = $region44
      $region43: #{tpu_custom_call.1} parent=39 // pred_region
        %s982 = smul.u32 32, %s20
        %p983 = scmp.lt.s32.totalorder %s982, 255
        %s984 = scalar_select %p983, %s982, 255
        %p985 = scmp.lt.s32.totalorder %s21, 0
        %s986 = scalar_select %p985, %s21, 0
        %s987 = sadd.s32 %s986, %s984
        %s988 = smul.addr %s987, 4
        %s989 = scalar_lea.vmem %s3, %s988
      $region44: #{tpu_custom_call.1} parent=39 // pred_fallthru
        _
    $region40: #{tpu_custom_call.1} parent=5 // pred_fallthru
      _
  $region6: #{tpu_custom_call.1} parent=0 // loop_footer
    %s13 = sadd.s32 1, %s9
  $region7: #{tpu_custom_call.1} parent=0 // loop_footer_branch
    %8 = sbr.rel target = $region3
  $region8: #{tpu_custom_call.1} parent=0 // loop_exit
    _

</llo_original>
